<compile_context>
chip_gen: v6e
topology: v6e:2x2x1
jax: 0.10.0
libtpu: 0.0.40
codegen_flags: <defaults>
</compile_context>

<pallas_src>
import functools

import jax
import jax.numpy as jnp
import numpy as np
from jax.experimental import pallas as pl
from jax.experimental.pallas import tpu as pltpu

LOG_STD_MAX = 2.0
LOG_STD_MIN = -5.0
_LOG_STD_CENTER = 0.5 * (LOG_STD_MAX + LOG_STD_MIN)      # -1.5
_LOG_STD_HALF_RANGE = 0.5 * (LOG_STD_MAX - LOG_STD_MIN)  # 3.5


def _round_up(x, m):
    return ((x + m - 1) // m) * m


# ---------------------------------------------------------------------------
# Kernel
# ---------------------------------------------------------------------------
def actor_kernel(x_ref,
                 w1_ref, b1_ref,
                 w2_ref, b2_ref,
                 w3_ref, b3_ref,
                 wh_ref, bh_ref,
                 out_ref, *, head_pad):
    x = x_ref[...]

    # Backbone: (Linear -> ReLU) x3.  bf16 operands on the MXU, f32 accumulate,
    # all elementwise math in f32.
    h = jnp.dot(x.astype(jnp.bfloat16), w1_ref[...],
                preferred_element_type=jnp.float32) + b1_ref[...]
    h = jnp.maximum(h, 0.0)
    h = jnp.dot(h.astype(jnp.bfloat16), w2_ref[...],
                preferred_element_type=jnp.float32) + b2_ref[...]
    h = jnp.maximum(h, 0.0)
    h = jnp.dot(h.astype(jnp.bfloat16), w3_ref[...],
                preferred_element_type=jnp.float32) + b3_ref[...]
    h = jnp.maximum(h, 0.0)

    # Fused heads: single MXU pass -> lane-dense [tile_b, 2*head_pad] slab.
    #   lanes [0, head_pad)          : mean (raw)
    #   lanes [head_pad, 2*head_pad) : log_std -> tanh squash + affine rescale
    y = jnp.dot(h.astype(jnp.bfloat16), wh_ref[...],
                preferred_element_type=jnp.float32) + bh_ref[...]
    lane = jax.lax.broadcasted_iota(jnp.int32, y.shape, dimension=1)
    squashed = _LOG_STD_CENTER + _LOG_STD_HALF_RANGE * jnp.tanh(y)  # EUP tanh
    out_ref[...] = jnp.where(lane >= head_pad, squashed, y)


# ---------------------------------------------------------------------------
# Parameter packing (one-time, outside the kernel)
# ---------------------------------------------------------------------------
def prepare_params(params):
    """Pack f32 params: bf16 weights, fused+padded head weight/bias."""
    hidden, act_dim = params["wm"].shape
    head_pad = _round_up(max(act_dim, 1), 64)   # 2*head_pad >= 128 lanes

    wh = jnp.zeros((hidden, 2 * head_pad), jnp.float32)
    wh = wh.at[:, :act_dim].set(params["wm"])
    wh = wh.at[:, head_pad:head_pad + act_dim].set(params["ws"])
    bh = jnp.zeros((1, 2 * head_pad), jnp.float32)
    bh = bh.at[:, :act_dim].set(params["bm"])
    bh = bh.at[:, head_pad:head_pad + act_dim].set(params["bs"])

    return dict(
        w1=params["w1"].astype(jnp.bfloat16), b1=params["b1"],
        w2=params["w2"].astype(jnp.bfloat16), b2=params["b2"],
        w3=params["w3"].astype(jnp.bfloat16), b3=params["b3"],
        wh=wh.astype(jnp.bfloat16), bh=bh,
        act_dim=act_dim, head_pad=head_pad,
    )


# ---------------------------------------------------------------------------
# Wrapper
# ---------------------------------------------------------------------------
def actor_forward(x, packed, *, tile_b=256):
    """Runs Actor.forward. Returns (mean, log_std), each [B, act_dim] f32."""
    B, obs_dim = x.shape
    act_dim = packed["act_dim"]
    head_pad = packed["head_pad"]
    out_w = 2 * head_pad

    # Batch tiling: single step for small B, otherwise TILE_B-sized blocks
    # (weights stay VMEM-resident across grid steps).
    if B <= tile_b:
        tile = B
        b_padded = B
    else:
        tile = tile_b
        b_padded = _round_up(B, tile)
    if b_padded != B:
        x = jnp.pad(x, ((0, b_padded - B), (0, 0)))
    grid = (pl.cdiv(b_padded, tile),)

    def resident(arr):
        return pl.BlockSpec(arr.shape, lambda i: (0, 0))

    in_specs = [
        pl.BlockSpec((tile, obs_dim), lambda i: (i, 0)),
        resident(packed["w1"]), resident(packed["b1"]),
        resident(packed["w2"]), resident(packed["b2"]),
        resident(packed["w3"]), resident(packed["b3"]),
        resident(packed["wh"]), resident(packed["bh"]),
    ]
    out_specs = pl.BlockSpec((tile, out_w), lambda i: (i, 0))
    out_shape = jax.ShapeDtypeStruct((b_padded, out_w), jnp.float32)

    kernel = functools.partial(actor_kernel, head_pad=head_pad)
    fused = pl.pallas_call(
        kernel,
        grid=grid,
        in_specs=in_specs,
        out_specs=out_specs,
        out_shape=out_shape,
        compiler_params=pltpu.CompilerParams(
            dimension_semantics=("parallel",),        # both TCs on v7x
            vmem_limit_bytes=32 * 1024 * 1024,        # explicit, fits v7x 64 MiB
        ),
    )(x,
      packed["w1"], packed["b1"],
      packed["w2"], packed["b2"],
      packed["w3"], packed["b3"],
      packed["wh"], packed["bh"])

    mean = fused[:B, :act_dim]
    log_std = fused[:B, head_pad:head_pad + act_dim]
    return mean, log_std


# ---------------------------------------------------------------------------
# Param init (PyTorch-style uniform(-1/sqrt(fan_in), 1/sqrt(fan_in)))
# ---------------------------------------------------------------------------
def init_linear(key, in_dim, out_dim):
    kw, kb = jax.random.split(key)
    bound = 1.0 / np.sqrt(in_dim)
    w = jax.random.uniform(kw, (in_dim, out_dim), jnp.float32, -bound, bound)
    b = jax.random.uniform(kb, (1, out_dim), jnp.float32, -bound, bound)
    return w, b


def make_params(key, obs_dim, act_dim, hidden=256):
    keys = jax.random.split(key, 5)
    w1, b1 = init_linear(keys[0], obs_dim, hidden)
    w2, b2 = init_linear(keys[1], hidden, hidden)
    w3, b3 = init_linear(keys[2], hidden, hidden)
    wm, bm = init_linear(keys[3], hidden, act_dim)
    ws, bs = init_linear(keys[4], hidden, act_dim)
    return dict(w1=w1, b1=b1, w2=w2, b2=b2, w3=w3, b3=b3,
                wm=wm, bm=bm, ws=ws, bs=bs)


# ---------------------------------------------------------------------------
# References
# ---------------------------------------------------------------------------
def reference_forward_f32(x, p):
    """Exact module semantics in f32 (matches the PyTorch forward)."""
    h = jnp.maximum(x @ p["w1"] + p["b1"], 0.0)
    h = jnp.maximum(h @ p["w2"] + p["b2"], 0.0)
    h = jnp.maximum(h @ p["w3"] + p["b3"], 0.0)
    mean = h @ p["wm"] + p["bm"]
    log_std = jnp.tanh(h @ p["ws"] + p["bs"])
    log_std = LOG_STD_MIN + 0.5 * (LOG_STD_MAX - LOG_STD_MIN) * (log_std + 1.0)
    return mean, log_std


def reference_forward_bf16(x, packed):
    """Mirror of the kernel math (bf16 weights, f32 accumulate)."""
    def mm(a, w):
        return jnp.dot(a.astype(jnp.bfloat16), w,
                       preferred_element_type=jnp.float32)
    h = jnp.maximum(mm(x, packed["w1"]) + packed["b1"], 0.0)
    h = jnp.maximum(mm(h, packed["w2"]) + packed["b2"], 0.0)
    h = jnp.maximum(mm(h, packed["w3"]) + packed["b3"], 0.0)
    y = mm(h, packed["wh"]) + packed["bh"]
    act_dim, head_pad = packed["act_dim"], packed["head_pad"]
    mean = y[:, :act_dim]
    log_std = (_LOG_STD_CENTER
               + _LOG_STD_HALF_RANGE * jnp.tanh(y[:, head_pad:head_pad + act_dim]))
    return mean, log_std


# ---------------------------------------------------------------------------
if __name__ == "__main__":
    B = 2          # batch
    OBS_DIM = 16   # np.prod(env.single_observation_space.shape)
    ACT_DIM = 8    # np.prod(env.single_action_space.shape)

    key = jax.random.PRNGKey(0)
    k_params, k_x = jax.random.split(key)

    params = make_params(k_params, OBS_DIM, ACT_DIM)
    packed = prepare_params(params)
    x = jax.random.normal(k_x, (B, OBS_DIM), jnp.float32)

    mean, log_std = actor_forward(x, packed)
    jax.block_until_ready((mean, log_std))

    assert mean.shape == (B, ACT_DIM) and log_std.shape == (B, ACT_DIM)

    # Tight check against a reference that mirrors the kernel's bf16 math.
    ref_mean_b, ref_log_std_b = reference_forward_bf16(x, packed)
    np.testing.assert_allclose(np.asarray(mean), np.asarray(ref_mean_b),
                               rtol=1e-3, atol=1e-3)
    np.testing.assert_allclose(np.asarray(log_std), np.asarray(ref_log_std_b),
                               rtol=1e-3, atol=1e-3)

    # Loose check against the full-f32 module semantics (bf16 weight rounding).
    ref_mean, ref_log_std = reference_forward_f32(x, params)
    np.testing.assert_allclose(np.asarray(mean), np.asarray(ref_mean),
                               rtol=5e-2, atol=5e-2)
    np.testing.assert_allclose(np.asarray(log_std), np.asarray(ref_log_std),
                               rtol=5e-2, atol=5e-2)

    # log_std must lie in [LOG_STD_MIN, LOG_STD_MAX]
    assert float(jnp.min(log_std)) >= LOG_STD_MIN - 1e-5
    assert float(jnp.max(log_std)) <= LOG_STD_MAX + 1e-5

    # TODO(synk): action_scale/action_bias, sampling and log_prob belong to
    # get_action/get_eval_action (not forward) and are left to the JAX host side.

    print("KERNEL_OK")
</pallas_src>

<mosaic_0001>
module attributes {stable_mosaic.version = 11 : i64} {
  func.func @actor_kernel(%arg0: i32, %arg1: memref<2x16xf32, #tpu.memory_space<vmem>>, %arg2: memref<16x256xbf16, #tpu.memory_space<vmem>>, %arg3: memref<1x256xf32, #tpu.memory_space<vmem>>, %arg4: memref<256x256xbf16, #tpu.memory_space<vmem>>, %arg5: memref<1x256xf32, #tpu.memory_space<vmem>>, %arg6: memref<256x256xbf16, #tpu.memory_space<vmem>>, %arg7: memref<1x256xf32, #tpu.memory_space<vmem>>, %arg8: memref<256x128xbf16, #tpu.memory_space<vmem>>, %arg9: memref<1x128xf32, #tpu.memory_space<vmem>>, %arg10: memref<2x128xf32, #tpu.memory_space<vmem>>) attributes {dimension_semantics = [#tpu.dimension_semantics<parallel>], iteration_bounds = array<i64: 1>, scalar_prefetch = 0 : i64, scratch_operands = 0 : i64, tpu.core_type = #tpu.core_type<tc>, window_params = [{transform_indices = @transform_0, window_bounds = array<i64: 2, 16>}, {pipeline_mode = #tpu.pipeline_mode<synchronous>, transform_indices = @transform_1, window_bounds = array<i64: 16, 256>}, {pipeline_mode = #tpu.pipeline_mode<synchronous>, transform_indices = @transform_2, window_bounds = array<i64: 1, 256>}, {pipeline_mode = #tpu.pipeline_mode<synchronous>, transform_indices = @transform_3, window_bounds = array<i64: 256, 256>}, {pipeline_mode = #tpu.pipeline_mode<synchronous>, transform_indices = @transform_4, window_bounds = array<i64: 1, 256>}, {pipeline_mode = #tpu.pipeline_mode<synchronous>, transform_indices = @transform_5, window_bounds = array<i64: 256, 256>}, {pipeline_mode = #tpu.pipeline_mode<synchronous>, transform_indices = @transform_6, window_bounds = array<i64: 1, 256>}, {pipeline_mode = #tpu.pipeline_mode<synchronous>, transform_indices = @transform_7, window_bounds = array<i64: 256, 128>}, {pipeline_mode = #tpu.pipeline_mode<synchronous>, transform_indices = @transform_8, window_bounds = array<i64: 1, 128>}, {transform_indices = @transform_9, window_bounds = array<i64: 2, 128>}]} {
    %c0 = arith.constant 0 : index
    %c0_0 = arith.constant 0 : index
    %0 = vector.load %arg1[%c0, %c0_0] : memref<2x16xf32, #tpu.memory_space<vmem>>, vector<2x16xf32>
    %1 = arith.truncf %0 : vector<2x16xf32> to vector<2x16xbf16>
    %c0_1 = arith.constant 0 : index
    %c0_2 = arith.constant 0 : index
    %2 = vector.load %arg2[%c0_1, %c0_2] : memref<16x256xbf16, #tpu.memory_space<vmem>>, vector<16x256xbf16>
    %cst = arith.constant dense<0.000000e+00> : vector<2x256xf32>
    %3 = tpu.matmul %1, %2, %cst {dimension_numbers = #tpu.dot_dimension_numbers<[1], [0], [0], [1], [0, 0, 1, 1], [], []>} : vector<2x16xbf16>, vector<16x256xbf16>, vector<2x256xf32> -> vector<2x256xf32>
    %c0_3 = arith.constant 0 : index
    %c0_4 = arith.constant 0 : index
    %4 = vector.load %arg3[%c0_3, %c0_4] : memref<1x256xf32, #tpu.memory_space<vmem>>, vector<1x256xf32>
    %5 = vector.broadcast %4 : vector<1x256xf32> to vector<2x256xf32>
    %6 = arith.addf %3, %5 : vector<2x256xf32>
    %cst_5 = arith.constant 0.000000e+00 : f32
    %7 = vector.broadcast %cst_5 : f32 to vector<2x256xf32>
    %8 = arith.maximumf %6, %7 : vector<2x256xf32>
    %9 = arith.truncf %8 : vector<2x256xf32> to vector<2x256xbf16>
    %c0_6 = arith.constant 0 : index
    %c0_7 = arith.constant 0 : index
    %10 = vector.load %arg4[%c0_6, %c0_7] : memref<256x256xbf16, #tpu.memory_space<vmem>>, vector<256x256xbf16>
    %cst_8 = arith.constant dense<0.000000e+00> : vector<2x256xf32>
    %11 = tpu.matmul %9, %10, %cst_8 {dimension_numbers = #tpu.dot_dimension_numbers<[1], [0], [0], [1], [0, 0, 1, 1], [], []>} : vector<2x256xbf16>, vector<256x256xbf16>, vector<2x256xf32> -> vector<2x256xf32>
    %c0_9 = arith.constant 0 : index
    %c0_10 = arith.constant 0 : index
    %12 = vector.load %arg5[%c0_9, %c0_10] : memref<1x256xf32, #tpu.memory_space<vmem>>, vector<1x256xf32>
    %13 = vector.broadcast %12 : vector<1x256xf32> to vector<2x256xf32>
    %14 = arith.addf %11, %13 : vector<2x256xf32>
    %cst_11 = arith.constant 0.000000e+00 : f32
    %15 = vector.broadcast %cst_11 : f32 to vector<2x256xf32>
    %16 = arith.maximumf %14, %15 : vector<2x256xf32>
    %17 = arith.truncf %16 : vector<2x256xf32> to vector<2x256xbf16>
    %c0_12 = arith.constant 0 : index
    %c0_13 = arith.constant 0 : index
    %18 = vector.load %arg6[%c0_12, %c0_13] : memref<256x256xbf16, #tpu.memory_space<vmem>>, vector<256x256xbf16>
    %cst_14 = arith.constant dense<0.000000e+00> : vector<2x256xf32>
    %19 = tpu.matmul %17, %18, %cst_14 {dimension_numbers = #tpu.dot_dimension_numbers<[1], [0], [0], [1], [0, 0, 1, 1], [], []>} : vector<2x256xbf16>, vector<256x256xbf16>, vector<2x256xf32> -> vector<2x256xf32>
    %c0_15 = arith.constant 0 : index
    %c0_16 = arith.constant 0 : index
    %20 = vector.load %arg7[%c0_15, %c0_16] : memref<1x256xf32, #tpu.memory_space<vmem>>, vector<1x256xf32>
    %21 = vector.broadcast %20 : vector<1x256xf32> to vector<2x256xf32>
    %22 = arith.addf %19, %21 : vector<2x256xf32>
    %cst_17 = arith.constant 0.000000e+00 : f32
    %23 = vector.broadcast %cst_17 : f32 to vector<2x256xf32>
    %24 = arith.maximumf %22, %23 : vector<2x256xf32>
    %25 = arith.truncf %24 : vector<2x256xf32> to vector<2x256xbf16>
    %c0_18 = arith.constant 0 : index
    %c0_19 = arith.constant 0 : index
    %26 = vector.load %arg8[%c0_18, %c0_19] : memref<256x128xbf16, #tpu.memory_space<vmem>>, vector<256x128xbf16>
    %cst_20 = arith.constant dense<0.000000e+00> : vector<2x128xf32>
    %27 = tpu.matmul %25, %26, %cst_20 {dimension_numbers = #tpu.dot_dimension_numbers<[1], [0], [0], [1], [0, 0, 1, 1], [], []>} : vector<2x256xbf16>, vector<256x128xbf16>, vector<2x128xf32> -> vector<2x128xf32>
    %c0_21 = arith.constant 0 : index
    %c0_22 = arith.constant 0 : index
    %28 = vector.load %arg9[%c0_21, %c0_22] : memref<1x128xf32, #tpu.memory_space<vmem>>, vector<1x128xf32>
    %29 = vector.broadcast %28 : vector<1x128xf32> to vector<2x128xf32>
    %30 = arith.addf %27, %29 : vector<2x128xf32>
    %31 = tpu.iota {dimensions = array<i32: 1>} : vector<2x128xi32>
    %32 = math.tanh %30 : vector<2x128xf32>
    %cst_23 = arith.constant 3.500000e+00 : f32
    %33 = vector.broadcast %cst_23 : f32 to vector<2x128xf32>
    %34 = arith.mulf %33, %32 : vector<2x128xf32>
    %cst_24 = arith.constant -1.500000e+00 : f32
    %35 = vector.broadcast %cst_24 : f32 to vector<2x128xf32>
    %36 = arith.addf %35, %34 : vector<2x128xf32>
    %c64_i32 = arith.constant 64 : i32
    %37 = vector.broadcast %c64_i32 : i32 to vector<2x128xi32>
    %38 = arith.cmpi sge, %31, %37 : vector<2x128xi32>
    %39 = arith.select %38, %36, %30 : vector<2x128xi1>, vector<2x128xf32>
    %c0_25 = arith.constant 0 : index
    %c0_26 = arith.constant 0 : index
    %40 = vector.load %arg10[%c0_25, %c0_26] : memref<2x128xf32, #tpu.memory_space<vmem>>, vector<2x128xf32>
    tpu.vector_store %arg10[%c0_25, %c0_26], %39 {strides = array<i32>} : memref<2x128xf32, #tpu.memory_space<vmem>>, vector<2x128xf32>,
    return
  }
  func.func @transform_0(%arg0: i32) -> (i32, i32) {
    %c0_i32 = arith.constant 0 : i32
    %c0_i32_0 = arith.constant 0 : i32
    return %arg0, %c0_i32 : i32, i32
  }
  func.func @transform_1(%arg0: i32) -> (i32, i32) {
    %c0_i32 = arith.constant 0 : i32
    %c0_i32_0 = arith.constant 0 : i32
    %c0_i32_1 = arith.constant 0 : i32
    return %c0_i32, %c0_i32_0 : i32, i32
  }
  func.func @transform_2(%arg0: i32) -> (i32, i32) {
    %c0_i32 = arith.constant 0 : i32
    %c0_i32_0 = arith.constant 0 : i32
    %c0_i32_1 = arith.constant 0 : i32
    return %c0_i32, %c0_i32_0 : i32, i32
  }
  func.func @transform_3(%arg0: i32) -> (i32, i32) {
    %c0_i32 = arith.constant 0 : i32
    %c0_i32_0 = arith.constant 0 : i32
    %c0_i32_1 = arith.constant 0 : i32
    return %c0_i32, %c0_i32_0 : i32, i32
  }
  func.func @transform_4(%arg0: i32) -> (i32, i32) {
    %c0_i32 = arith.constant 0 : i32
    %c0_i32_0 = arith.constant 0 : i32
    %c0_i32_1 = arith.constant 0 : i32
    return %c0_i32, %c0_i32_0 : i32, i32
  }
  func.func @transform_5(%arg0: i32) -> (i32, i32) {
    %c0_i32 = arith.constant 0 : i32
    %c0_i32_0 = arith.constant 0 : i32
    %c0_i32_1 = arith.constant 0 : i32
    return %c0_i32, %c0_i32_0 : i32, i32
  }
  func.func @transform_6(%arg0: i32) -> (i32, i32) {
    %c0_i32 = arith.constant 0 : i32
    %c0_i32_0 = arith.constant 0 : i32
    %c0_i32_1 = arith.constant 0 : i32
    return %c0_i32, %c0_i32_0 : i32, i32
  }
  func.func @transform_7(%arg0: i32) -> (i32, i32) {
    %c0_i32 = arith.constant 0 : i32
    %c0_i32_0 = arith.constant 0 : i32
    %c0_i32_1 = arith.constant 0 : i32
    return %c0_i32, %c0_i32_0 : i32, i32
  }
  func.func @transform_8(%arg0: i32) -> (i32, i32) {
    %c0_i32 = arith.constant 0 : i32
    %c0_i32_0 = arith.constant 0 : i32
    %c0_i32_1 = arith.constant 0 : i32
    return %c0_i32, %c0_i32_0 : i32, i32
  }
  func.func @transform_9(%arg0: i32) -> (i32, i32) {
    %c0_i32 = arith.constant 0 : i32
    %c0_i32_0 = arith.constant 0 : i32
    return %arg0, %c0_i32 : i32, i32
  }
}

</mosaic_0001>

<llo_original>
// kernel: tpu_custom_call.1
$region0: #{tpu_custom_call.1}
  #allocation0 [shape = 'u32[]', space=smem, size = 0x4, offset = 0x4, fixed_abs, tag = 'smem constant byte address 0x4 - core index']
  #allocation1 [shape = 'u32[144,128]{1,0:T(1,128)}', space=vmem, size = 0x12000, scoped, tag = 'internal scratch']
  %s0 = inlined_call_operand.hbm [shape: f32[2,16], index: 0, kind: input, shape index: {}]
  %s1 = inlined_call_operand.hbm [shape: bf16[16,256], index: 1, kind: input, shape index: {}]
  %s2 = inlined_call_operand.vmem [shape: f32[1,256], index: 2, kind: input, shape index: {}]
  %s3 = inlined_call_operand.hbm [shape: bf16[256,256], index: 3, kind: input, shape index: {}]
  %s4 = inlined_call_operand.vmem [shape: f32[1,256], index: 4, kind: input, shape index: {}]
  %s5 = inlined_call_operand.hbm [shape: bf16[256,256], index: 5, kind: input, shape index: {}]
  %s6 = inlined_call_operand.vmem [shape: f32[1,256], index: 6, kind: input, shape index: {}]
  %s7 = inlined_call_operand.hbm [shape: bf16[256,128], index: 7, kind: input, shape index: {}]
  %s8 = inlined_call_operand.vmem [shape: f32[1,128], index: 8, kind: input, shape index: {}]
  %s9 = inlined_call_operand.hbm [shape: f32[2,128], index: 9, kind: output, shape index: {}]
  %s10 = sld [smem:[#allocation0]]
  $region66: #{tpu_custom_call.1} parent=0
    _
  %s12 = ssub.s32 1, %s10
  %s13 = scalar_select 0, %s12, %s10
  $region1: #{tpu_custom_call.1} parent=0
    #allocation2 [shape = 'u8[1024]{0}', space=vmem, size = 0x400, scoped, tag = 'input window, operand 0, single buffered']
    #allocation3 [shape = 's32[1]{0}', space=sflag, size = 0x4, scoped, tag = 'scoped memory for tpu_custom_call.1']
    #allocation4 [shape = 's32[1]{0}', space=sflag, size = 0x4, scoped, tag = 'scoped memory for tpu_custom_call.1']
    #allocation5 [shape = 'u8[8192]{0}', space=vmem, size = 0x2000, scoped, tag = 'input window, operand 1, single buffered']
    #allocation6 [shape = 's32[1]{0}', space=sflag, size = 0x4, scoped, tag = 'scoped memory for tpu_custom_call.1']
    #allocation7 [shape = 'u8[131072]{0}', space=vmem, size = 0x20000, scoped, tag = 'input window, operand 3, single buffered']
    #allocation8 [shape = 'u8[131072]{0}', space=vmem, size = 0x20000, scoped, tag = 'input window, operand 5, single buffered']
    #allocation9 [shape = 's32[1]{0}', space=sflag, size = 0x4, scoped, tag = 'scoped memory for tpu_custom_call.1']
    #allocation10 [shape = 'u8[65536]{0}', space=vmem, size = 0x10000, scoped, tag = 'input window, operand 7, single buffered']
    #allocation11 [shape = 'u8[1024]{0}', space=vmem, size = 0x400, scoped, tag = 'output window, operand 0, single buffered']
    %14 = vsyncpa [#allocation3], 0
    %15 = vsyncpa [#allocation6], 0
    %16 = vsyncpa [#allocation9], 0
    %17 = vsyncpa [#allocation4], 0
    // Predicated region
    $region2: #{tpu_custom_call.1} parent=1 // pred_check
      _
    $region3: #{tpu_custom_call.1} parent=1 // pred_check_branch
      %19 = sbr.rel (0) target = $region5
    $region4: #{tpu_custom_call.1} parent=1 // pred_region
      %s21 = ssub.s32 32, 32
      %22 = vsyncadd [#allocation3], %s21
      %s24 = sshll.u32 [#allocation2], 4
      %s25 = int_to_ptr.vmem [resolvable:$true] %s24
      %27 = dma.hbm_to_vmem [thread:$0]  %s0, 32, %s25, [#allocation3]
    $region5: #{tpu_custom_call.1} parent=1 // pred_fallthru
      _
    // Predicated region
    $region6: #{tpu_custom_call.1} parent=1 // pred_check
      _
    $region7: #{tpu_custom_call.1} parent=1 // pred_check_branch
      %29 = sbr.rel (0) target = $region9
    $region8: #{tpu_custom_call.1} parent=1 // pred_region
      %s31 = ssub.s32 256, 256
      %32 = vsyncadd [#allocation6], %s31
      %s33 = sshll.u32 [#allocation5], 4
      %s34 = int_to_ptr.vmem [resolvable:$true] %s33
      %39 = dma.hbm_to_vmem [thread:$0]  %s1, 256, %s34, [#allocation6], 128, 128, 8
    $region9: #{tpu_custom_call.1} parent=1 // pred_fallthru
      _
    // Predicated region
    $region10: #{tpu_custom_call.1} parent=1 // pred_check
      _
    $region11: #{tpu_custom_call.1} parent=1 // pred_check_branch
      %41 = sbr.rel (0) target = $region13
    $region12: #{tpu_custom_call.1} parent=1 // pred_region
      _
    $region13: #{tpu_custom_call.1} parent=1 // pred_fallthru
      _
    // Predicated region
    $region14: #{tpu_custom_call.1} parent=1 // pred_check
      _
    $region15: #{tpu_custom_call.1} parent=1 // pred_check_branch
      %43 = sbr.rel (0) target = $region17
    $region16: #{tpu_custom_call.1} parent=1 // pred_region
      %s45 = ssub.s32 4096, 4096
      %46 = vsyncadd [#allocation6], %s45
      %s47 = sshll.u32 [#allocation7], 4
      %s48 = int_to_ptr.vmem [resolvable:$true] %s47
      %53 = dma.hbm_to_vmem [thread:$0]  %s3, 4096, %s48, [#allocation6], 128, 128, 8
    $region17: #{tpu_custom_call.1} parent=1 // pred_fallthru
      _
    // Predicated region
    $region18: #{tpu_custom_call.1} parent=1 // pred_check
      _
    $region19: #{tpu_custom_call.1} parent=1 // pred_check_branch
      %55 = sbr.rel (0) target = $region21
    $region20: #{tpu_custom_call.1} parent=1 // pred_region
      _
    $region21: #{tpu_custom_call.1} parent=1 // pred_fallthru
      _
    // Predicated region
    $region22: #{tpu_custom_call.1} parent=1 // pred_check
      _
    $region23: #{tpu_custom_call.1} parent=1 // pred_check_branch
      %57 = sbr.rel (0) target = $region25
    $region24: #{tpu_custom_call.1} parent=1 // pred_region
      %s59 = ssub.s32 4096, 4096
      %60 = vsyncadd [#allocation9], %s59
      %s61 = sshll.u32 [#allocation8], 4
      %s62 = int_to_ptr.vmem [resolvable:$true] %s61
      %67 = dma.hbm_to_vmem [thread:$0]  %s5, 4096, %s62, [#allocation9], 128, 128, 8
    $region25: #{tpu_custom_call.1} parent=1 // pred_fallthru
      _
    // Predicated region
    $region26: #{tpu_custom_call.1} parent=1 // pred_check
      _
    $region27: #{tpu_custom_call.1} parent=1 // pred_check_branch
      %69 = sbr.rel (0) target = $region29
    $region28: #{tpu_custom_call.1} parent=1 // pred_region
      _
    $region29: #{tpu_custom_call.1} parent=1 // pred_fallthru
      _
    // Predicated region
    $region30: #{tpu_custom_call.1} parent=1 // pred_check
      _
    $region31: #{tpu_custom_call.1} parent=1 // pred_check_branch
      %71 = sbr.rel (0) target = $region33
    $region32: #{tpu_custom_call.1} parent=1 // pred_region
      %s73 = ssub.s32 2048, 2048
      %74 = vsyncadd [#allocation9], %s73
      %s75 = sshll.u32 [#allocation10], 4
      %s76 = int_to_ptr.vmem [resolvable:$true] %s75
      %81 = dma.hbm_to_vmem [thread:$0]  %s7, 2048, %s76, [#allocation9], 64, 64, 4
    $region33: #{tpu_custom_call.1} parent=1 // pred_fallthru
      _
    // Predicated region
    $region34: #{tpu_custom_call.1} parent=1 // pred_check
      _
    $region35: #{tpu_custom_call.1} parent=1 // pred_check_branch
      %83 = sbr.rel (0) target = $region37
    $region36: #{tpu_custom_call.1} parent=1 // pred_region
      _
    $region37: #{tpu_custom_call.1} parent=1 // pred_fallthru
      _
    // Predicated region
    $region38: #{tpu_custom_call.1} parent=1 // pred_check
      _
    $region39: #{tpu_custom_call.1} parent=1 // pred_check_branch
      %85 = sbr.rel (0) target = $region41
    $region40: #{tpu_custom_call.1} parent=1 // pred_region
      %86 = dma.done [#allocation3], 32
    $region41: #{tpu_custom_call.1} parent=1 // pred_fallthru
      _
    // Predicated region
    $region42: #{tpu_custom_call.1} parent=1 // pred_check
      _
    $region43: #{tpu_custom_call.1} parent=1 // pred_check_branch
      %88 = sbr.rel (0) target = $region45
    $region44: #{tpu_custom_call.1} parent=1 // pred_region
      %89 = dma.done [#allocation6], 256
    $region45: #{tpu_custom_call.1} parent=1 // pred_fallthru
      _
    // Predicated region
    $region46: #{tpu_custom_call.1} parent=1 // pred_check
      _
    $region47: #{tpu_custom_call.1} parent=1 // pred_check_branch
      %91 = sbr.rel (0) target = $region49
    $region48: #{tpu_custom_call.1} parent=1 // pred_region
      %92 = dma.done [#allocation6], 4096
    $region49: #{tpu_custom_call.1} parent=1 // pred_fallthru
      _
    // Predicated region
    $region50: #{tpu_custom_call.1} parent=1 // pred_check
      _
    $region51: #{tpu_custom_call.1} parent=1 // pred_check_branch
      %94 = sbr.rel (0) target = $region53
    $region52: #{tpu_custom_call.1} parent=1 // pred_region
      %95 = dma.done [#allocation9], 4096
    $region53: #{tpu_custom_call.1} parent=1 // pred_fallthru
      _
    // Predicated region
    $region54: #{tpu_custom_call.1} parent=1 // pred_check
      _
    $region55: #{tpu_custom_call.1} parent=1 // pred_check_branch
      %97 = sbr.rel (0) target = $region57
    $region56: #{tpu_custom_call.1} parent=1 // pred_region
      %98 = dma.done [#allocation9], 2048
    $region57: #{tpu_custom_call.1} parent=1 // pred_fallthru
      _
    %v100 = vld [vmem:[#allocation2] sm:$0x3]
    %v101 = vpack.c.bf16 %v100, %v100
    %v102 = vld [vmem:[#allocation5] sm:$0xff]
    %v103 = vld [vmem:[#allocation5 + $0x8] sm:$0xff]
    %v104 = vld [vmem:[%s2] sm:$0x3]
    %v106 = vlaneseq
    %v107 = vshrl.u32 %v106, 7
    %v108 = vsub.s32 0, %v107
    %v109 = vrot.slane %v104, %v108
    %v110 = vlaneseq
    %v111 = vshrl.u32 %v110, 7
    %v112 = vsub.s32 1, %v111
    %v113 = vrot.slane %v104, %v112
    %v118 = vunpack.c.l.b16 %v102
    %v119 = vunpack.c.h.b16 %v102
    %v120 = vunpack.c.l.b16 %v103
    %v121 = vunpack.c.h.b16 %v103
    %v122 = vpack.c.b16 %v120, %v118
    %v123 = vpack.c.b16 %v121, %v119
    %vm126 = vcmask 130048
    %v128 = vsel %vm126, %v101, 0
    %130 = vmatprep.subr.bf16.mxu0 0
    %131 = vmatpush1.bf16.msra.mxu0 0
    %132 = vmatprep.subr.bf16.mxu0 0
    %133 = vmatpush1.bf16.msra.mxu0 0
    %134 = vmatprep.subr.bf16.mxu0 0
    %135 = vmatpush1.bf16.msra.mxu0 0
    %136 = vmatprep.subr.bf16.mxu0 0
    %137 = vmatpush1.bf16.msra.mxu0 0
    %138 = vmatprep.subr.bf16.mxu0 0
    %139 = vmatpush1.bf16.msra.mxu0 0
    %140 = vmatprep.subr.bf16.mxu0 0
    %141 = vmatpush1.bf16.msra.mxu0 0
    %142 = vmatprep.subr.bf16.mxu0 0
    %143 = vmatpush1.bf16.msra.mxu0 0
    %144 = vmatprep.subr.bf16.mxu0 %v123
    %145 = vmatpush1.bf16.msra.mxu0 %v122
    %146 = vmatprep.subr.bf16.mxu0 0
    %147 = vmatpush2.bf16.msra.mxu0 0
    %148 = vmatprep.subr.bf16.mxu0 0
    %149 = vmatpush2.bf16.msra.mxu0 0
    %150 = vmatprep.subr.bf16.mxu0 0
    %151 = vmatpush2.bf16.msra.mxu0 0
    %152 = vmatprep.subr.bf16.mxu0 0
    %153 = vmatpush2.bf16.msra.mxu0 0
    %154 = vmatprep.subr.bf16.mxu0 0
    %155 = vmatpush2.bf16.msra.mxu0 0
    %156 = vmatprep.subr.bf16.mxu0 0
    %157 = vmatpush2.bf16.msra.mxu0 0
    %158 = vmatprep.subr.bf16.mxu0 0
    %159 = vmatpush2.bf16.msra.mxu0 0
    %160 = vmatprep.subr.bf16.mxu0 0
    %161 = vmatpush2.bf16.msra.mxu0 0
    %162 = vmatprep.mubr.bf16.mxu0 0
    %163 = vmatmul.mubr.bf16.gmra.mxu0 %v128
    %v164 = vpop.f32.mrf.mxu0
    %v165 = vadd.f32 %v109, %v164
    %v166 = vpop.f32.mrf.mxu0
    %v167 = vadd.f32 %v113, %v166
    %v168 = vpop.f32.mrf.mxu0
    %v169 = vpop.f32.mrf.mxu0
    %170 = vdwg.mxu0
    %v171 = vmax.f32 %v165, 0.0
    %v172 = vmax.f32 %v167, 0.0
    %v173 = vpack.c.bf16 %v171, %v171
    %v174 = vpack.c.bf16 %v172, %v172
    %v175 = vld [vmem:[#allocation7] sm:$0xff]
    %v176 = vld [vmem:[#allocation7 + $0x8] sm:$0xff]
    %v177 = vld [vmem:[#allocation7 + $0x10] sm:$0xff]
    %v178 = vld [vmem:[#allocation7 + $0x18] sm:$0xff]
    %v179 = vld [vmem:[#allocation7 + $0x20] sm:$0xff]
    %v180 = vld [vmem:[#allocation7 + $0x28] sm:$0xff]
    %v181 = vld [vmem:[#allocation7 + $0x30] sm:$0xff]
    %v182 = vld [vmem:[#allocation7 + $0x38] sm:$0xff]
    %v183 = vld [vmem:[#allocation7 + $0x40] sm:$0xff]
    %v184 = vld [vmem:[#allocation7 + $0x48] sm:$0xff]
    %v185 = vld [vmem:[#allocation7 + $0x50] sm:$0xff]
    %v186 = vld [vmem:[#allocation7 + $0x58] sm:$0xff]
    %v187 = vld [vmem:[#allocation7 + $0x60] sm:$0xff]
    %v188 = vld [vmem:[#allocation7 + $0x68] sm:$0xff]
    %v189 = vld [vmem:[#allocation7 + $0x70] sm:$0xff]
    %v190 = vld [vmem:[#allocation7 + $0x78] sm:$0xff]
    %v191 = vld [vmem:[#allocation7 + $0x80] sm:$0xff]
    %v192 = vld [vmem:[#allocation7 + $0x88] sm:$0xff]
    %v193 = vld [vmem:[#allocation7 + $0x90] sm:$0xff]
    %v194 = vld [vmem:[#allocation7 + $0x98] sm:$0xff]
    %v195 = vld [vmem:[#allocation7 + $0xa0] sm:$0xff]
    %v196 = vld [vmem:[#allocation7 + $0xa8] sm:$0xff]
    %v197 = vld [vmem:[#allocation7 + $0xb0] sm:$0xff]
    %v198 = vld [vmem:[#allocation7 + $0xb8] sm:$0xff]
    %v199 = vld [vmem:[#allocation7 + $0xc0] sm:$0xff]
    %v200 = vld [vmem:[#allocation7 + $0xc8] sm:$0xff]
    %v201 = vld [vmem:[#allocation7 + $0xd0] sm:$0xff]
    %v202 = vld [vmem:[#allocation7 + $0xd8] sm:$0xff]
    %v203 = vld [vmem:[#allocation7 + $0xe0] sm:$0xff]
    %v204 = vld [vmem:[#allocation7 + $0xe8] sm:$0xff]
    %v205 = vld [vmem:[#allocation7 + $0xf0] sm:$0xff]
    %v206 = vld [vmem:[#allocation7 + $0xf8] sm:$0xff]
    %v207 = vld [vmem:[%s4] sm:$0x3]
    %v209 = vlaneseq
    %v210 = vshrl.u32 %v209, 7
    %v211 = vsub.s32 0, %v210
    %v212 = vrot.slane %v207, %v211
    %v213 = vlaneseq
    %v214 = vshrl.u32 %v213, 7
    %v215 = vsub.s32 1, %v214
    %v216 = vrot.slane %v207, %v215
    %v251 = vunpack.c.l.b16 %v175
    %v252 = vunpack.c.h.b16 %v175
    %v253 = vunpack.c.l.b16 %v176
    %v254 = vunpack.c.h.b16 %v176
    %v255 = vunpack.c.l.b16 %v177
    %v256 = vunpack.c.h.b16 %v177
    %v257 = vunpack.c.l.b16 %v178
    %v258 = vunpack.c.h.b16 %v178
    %v259 = vunpack.c.l.b16 %v179
    %v260 = vunpack.c.h.b16 %v179
    %v261 = vunpack.c.l.b16 %v180
    %v262 = vunpack.c.h.b16 %v180
    %v263 = vunpack.c.l.b16 %v181
    %v264 = vunpack.c.h.b16 %v181
    %v265 = vunpack.c.l.b16 %v182
    %v266 = vunpack.c.h.b16 %v182
    %v267 = vunpack.c.l.b16 %v183
    %v268 = vunpack.c.h.b16 %v183
    %v269 = vunpack.c.l.b16 %v184
    %v270 = vunpack.c.h.b16 %v184
    %v271 = vunpack.c.l.b16 %v185
    %v272 = vunpack.c.h.b16 %v185
    %v273 = vunpack.c.l.b16 %v186
    %v274 = vunpack.c.h.b16 %v186
    %v275 = vunpack.c.l.b16 %v187
    %v276 = vunpack.c.h.b16 %v187
    %v277 = vunpack.c.l.b16 %v188
    %v278 = vunpack.c.h.b16 %v188
    %v279 = vunpack.c.l.b16 %v189
    %v280 = vunpack.c.h.b16 %v189
    %v281 = vunpack.c.l.b16 %v190
    %v282 = vunpack.c.h.b16 %v190
    %v283 = vunpack.c.l.b16 %v191
    %v284 = vunpack.c.h.b16 %v191
    %v285 = vunpack.c.l.b16 %v192
    %v286 = vunpack.c.h.b16 %v192
    %v287 = vunpack.c.l.b16 %v193
    %v288 = vunpack.c.h.b16 %v193
    %v289 = vunpack.c.l.b16 %v194
    %v290 = vunpack.c.h.b16 %v194
    %v291 = vunpack.c.l.b16 %v195
    %v292 = vunpack.c.h.b16 %v195
    %v293 = vunpack.c.l.b16 %v196
    %v294 = vunpack.c.h.b16 %v196
    %v295 = vunpack.c.l.b16 %v197
    %v296 = vunpack.c.h.b16 %v197
    %v297 = vunpack.c.l.b16 %v198
    %v298 = vunpack.c.h.b16 %v198
    %v299 = vunpack.c.l.b16 %v199
    %v300 = vunpack.c.h.b16 %v199
    %v301 = vunpack.c.l.b16 %v200
    %v302 = vunpack.c.h.b16 %v200
    %v303 = vunpack.c.l.b16 %v201
    %v304 = vunpack.c.h.b16 %v201
    %v305 = vunpack.c.l.b16 %v202
    %v306 = vunpack.c.h.b16 %v202
    %v307 = vunpack.c.l.b16 %v203
    %v308 = vunpack.c.h.b16 %v203
    %v309 = vunpack.c.l.b16 %v204
    %v310 = vunpack.c.h.b16 %v204
    %v311 = vunpack.c.l.b16 %v205
    %v312 = vunpack.c.h.b16 %v205
    %v313 = vunpack.c.l.b16 %v206
    %v314 = vunpack.c.h.b16 %v206
    %v315 = vpack.c.b16 %v253, %v251
    %v316 = vpack.c.b16 %v254, %v252
    %v317 = vpack.c.b16 %v257, %v255
    %v318 = vpack.c.b16 %v258, %v256
    %v319 = vpack.c.b16 %v261, %v259
    %v320 = vpack.c.b16 %v262, %v260
    %v321 = vpack.c.b16 %v265, %v263
    %v322 = vpack.c.b16 %v266, %v264
    %v323 = vpack.c.b16 %v269, %v267
    %v324 = vpack.c.b16 %v270, %v268
    %v325 = vpack.c.b16 %v273, %v271
    %v326 = vpack.c.b16 %v274, %v272
    %v327 = vpack.c.b16 %v277, %v275
    %v328 = vpack.c.b16 %v278, %v276
    %v329 = vpack.c.b16 %v281, %v279
    %v330 = vpack.c.b16 %v282, %v280
    %v331 = vpack.c.b16 %v285, %v283
    %v332 = vpack.c.b16 %v286, %v284
    %v333 = vpack.c.b16 %v289, %v287
    %v334 = vpack.c.b16 %v290, %v288
    %v335 = vpack.c.b16 %v293, %v291
    %v336 = vpack.c.b16 %v294, %v292
    %v337 = vpack.c.b16 %v297, %v295
    %v338 = vpack.c.b16 %v298, %v296
    %v339 = vpack.c.b16 %v301, %v299
    %v340 = vpack.c.b16 %v302, %v300
    %v341 = vpack.c.b16 %v305, %v303
    %v342 = vpack.c.b16 %v306, %v304
    %v343 = vpack.c.b16 %v309, %v307
    %v344 = vpack.c.b16 %v310, %v308
    %v345 = vpack.c.b16 %v313, %v311
    %v346 = vpack.c.b16 %v314, %v312
    %379 = vmatprep.subr.bf16.mxu0 %v330
    %380 = vmatpush1.bf16.msra.mxu0 %v329
    %381 = vmatprep.subr.bf16.mxu0 %v328
    %382 = vmatpush1.bf16.msra.mxu0 %v327
    %383 = vmatprep.subr.bf16.mxu0 %v326
    %384 = vmatpush1.bf16.msra.mxu0 %v325
    %385 = vmatprep.subr.bf16.mxu0 %v324
    %386 = vmatpush1.bf16.msra.mxu0 %v323
    %387 = vmatprep.subr.bf16.mxu0 %v322
    %388 = vmatpush1.bf16.msra.mxu0 %v321
    %389 = vmatprep.subr.bf16.mxu0 %v320
    %390 = vmatpush1.bf16.msra.mxu0 %v319
    %391 = vmatprep.subr.bf16.mxu0 %v318
    %392 = vmatpush1.bf16.msra.mxu0 %v317
    %393 = vmatprep.subr.bf16.mxu0 %v316
    %394 = vmatpush1.bf16.msra.mxu0 %v315
    %395 = vmatprep.subr.bf16.mxu0 %v346
    %396 = vmatpush2.bf16.msra.mxu0 %v345
    %397 = vmatprep.subr.bf16.mxu0 %v344
    %398 = vmatpush2.bf16.msra.mxu0 %v343
    %399 = vmatprep.subr.bf16.mxu0 %v342
    %400 = vmatpush2.bf16.msra.mxu0 %v341
    %401 = vmatprep.subr.bf16.mxu0 %v340
    %402 = vmatpush2.bf16.msra.mxu0 %v339
    %403 = vmatprep.subr.bf16.mxu0 %v338
    %404 = vmatpush2.bf16.msra.mxu0 %v337
    %405 = vmatprep.subr.bf16.mxu0 %v336
    %406 = vmatpush2.bf16.msra.mxu0 %v335
    %407 = vmatprep.subr.bf16.mxu0 %v334
    %408 = vmatpush2.bf16.msra.mxu0 %v333
    %409 = vmatprep.subr.bf16.mxu0 %v332
    %410 = vmatpush2.bf16.msra.mxu0 %v331
    %411 = vmatprep.mubr.bf16.mxu0 %v174
    %412 = vmatmul.mubr.bf16.gmra.mxu0 %v173
    %v413 = vpop.f32.mrf.mxu0
    %v414 = vadd.f32 %v212, %v413
    %v415 = vpop.f32.mrf.mxu0
    %v416 = vadd.f32 %v216, %v415
    %v417 = vpop.f32.mrf.mxu0
    %v418 = vpop.f32.mrf.mxu0
    %419 = vdwg.mxu0
    %v420 = vmax.f32 %v414, 0.0
    %v421 = vmax.f32 %v416, 0.0
    %v422 = vpack.c.bf16 %v420, %v420
    %v423 = vpack.c.bf16 %v421, %v421
    %v424 = vld [vmem:[#allocation8] sm:$0xff]
    %v425 = vld [vmem:[#allocation8 + $0x8] sm:$0xff]
    %v426 = vld [vmem:[#allocation8 + $0x10] sm:$0xff]
    %v427 = vld [vmem:[#allocation8 + $0x18] sm:$0xff]
    %v428 = vld [vmem:[#allocation8 + $0x20] sm:$0xff]
    %v429 = vld [vmem:[#allocation8 + $0x28] sm:$0xff]
    %v430 = vld [vmem:[#allocation8 + $0x30] sm:$0xff]
    %v431 = vld [vmem:[#allocation8 + $0x38] sm:$0xff]
    %v432 = vld [vmem:[#allocation8 + $0x40] sm:$0xff]
    %v433 = vld [vmem:[#allocation8 + $0x48] sm:$0xff]
    %v434 = vld [vmem:[#allocation8 + $0x50] sm:$0xff]
    %v435 = vld [vmem:[#allocation8 + $0x58] sm:$0xff]
    %v436 = vld [vmem:[#allocation8 + $0x60] sm:$0xff]
    %v437 = vld [vmem:[#allocation8 + $0x68] sm:$0xff]
    %v438 = vld [vmem:[#allocation8 + $0x70] sm:$0xff]
    %v439 = vld [vmem:[#allocation8 + $0x78] sm:$0xff]
    %v440 = vld [vmem:[#allocation8 + $0x80] sm:$0xff]
    %v441 = vld [vmem:[#allocation8 + $0x88] sm:$0xff]
    %v442 = vld [vmem:[#allocation8 + $0x90] sm:$0xff]
    %v443 = vld [vmem:[#allocation8 + $0x98] sm:$0xff]
    %v444 = vld [vmem:[#allocation8 + $0xa0] sm:$0xff]
    %v445 = vld [vmem:[#allocation8 + $0xa8] sm:$0xff]
    %v446 = vld [vmem:[#allocation8 + $0xb0] sm:$0xff]
    %v447 = vld [vmem:[#allocation8 + $0xb8] sm:$0xff]
    %v448 = vld [vmem:[#allocation8 + $0xc0] sm:$0xff]
    %v449 = vld [vmem:[#allocation8 + $0xc8] sm:$0xff]
    %v450 = vld [vmem:[#allocation8 + $0xd0] sm:$0xff]
    %v451 = vld [vmem:[#allocation8 + $0xd8] sm:$0xff]
    %v452 = vld [vmem:[#allocation8 + $0xe0] sm:$0xff]
    %v453 = vld [vmem:[#allocation8 + $0xe8] sm:$0xff]
    %v454 = vld [vmem:[#allocation8 + $0xf0] sm:$0xff]
    %v455 = vld [vmem:[#allocation8 + $0xf8] sm:$0xff]
    %v456 = vld [vmem:[%s6] sm:$0x3]
    %v458 = vlaneseq
    %v459 = vshrl.u32 %v458, 7
    %v460 = vsub.s32 0, %v459
    %v461 = vrot.slane %v456, %v460
    %v462 = vlaneseq
    %v463 = vshrl.u32 %v462, 7
    %v464 = vsub.s32 1, %v463
    %v465 = vrot.slane %v456, %v464
    %v500 = vunpack.c.l.b16 %v424
    %v501 = vunpack.c.h.b16 %v424
    %v502 = vunpack.c.l.b16 %v425
    %v503 = vunpack.c.h.b16 %v425
    %v504 = vunpack.c.l.b16 %v426
    %v505 = vunpack.c.h.b16 %v426
    %v506 = vunpack.c.l.b16 %v427
    %v507 = vunpack.c.h.b16 %v427
    %v508 = vunpack.c.l.b16 %v428
    %v509 = vunpack.c.h.b16 %v428
    %v510 = vunpack.c.l.b16 %v429
    %v511 = vunpack.c.h.b16 %v429
    %v512 = vunpack.c.l.b16 %v430
    %v513 = vunpack.c.h.b16 %v430
    %v514 = vunpack.c.l.b16 %v431
    %v515 = vunpack.c.h.b16 %v431
    %v516 = vunpack.c.l.b16 %v432
    %v517 = vunpack.c.h.b16 %v432
    %v518 = vunpack.c.l.b16 %v433
    %v519 = vunpack.c.h.b16 %v433
    %v520 = vunpack.c.l.b16 %v434
    %v521 = vunpack.c.h.b16 %v434
    %v522 = vunpack.c.l.b16 %v435
    %v523 = vunpack.c.h.b16 %v435
    %v524 = vunpack.c.l.b16 %v436
    %v525 = vunpack.c.h.b16 %v436
    %v526 = vunpack.c.l.b16 %v437
    %v527 = vunpack.c.h.b16 %v437
    %v528 = vunpack.c.l.b16 %v438
    %v529 = vunpack.c.h.b16 %v438
    %v530 = vunpack.c.l.b16 %v439
    %v531 = vunpack.c.h.b16 %v439
    %v532 = vunpack.c.l.b16 %v440
    %v533 = vunpack.c.h.b16 %v440
    %v534 = vunpack.c.l.b16 %v441
    %v535 = vunpack.c.h.b16 %v441
    %v536 = vunpack.c.l.b16 %v442
    %v537 = vunpack.c.h.b16 %v442
    %v538 = vunpack.c.l.b16 %v443
    %v539 = vunpack.c.h.b16 %v443
    %v540 = vunpack.c.l.b16 %v444
    %v541 = vunpack.c.h.b16 %v444
    %v542 = vunpack.c.l.b16 %v445
    %v543 = vunpack.c.h.b16 %v445
    %v544 = vunpack.c.l.b16 %v446
    %v545 = vunpack.c.h.b16 %v446
    %v546 = vunpack.c.l.b16 %v447
    %v547 = vunpack.c.h.b16 %v447
    %v548 = vunpack.c.l.b16 %v448
    %v549 = vunpack.c.h.b16 %v448
    %v550 = vunpack.c.l.b16 %v449
    %v551 = vunpack.c.h.b16 %v449
    %v552 = vunpack.c.l.b16 %v450
    %v553 = vunpack.c.h.b16 %v450
    %v554 = vunpack.c.l.b16 %v451
    %v555 = vunpack.c.h.b16 %v451
    %v556 = vunpack.c.l.b16 %v452
    %v557 = vunpack.c.h.b16 %v452
    %v558 = vunpack.c.l.b16 %v453
    %v559 = vunpack.c.h.b16 %v453
    %v560 = vunpack.c.l.b16 %v454
    %v561 = vunpack.c.h.b16 %v454
    %v562 = vunpack.c.l.b16 %v455
    %v563 = vunpack.c.h.b16 %v455
    %v564 = vpack.c.b16 %v502, %v500
    %v565 = vpack.c.b16 %v503, %v501
    %v566 = vpack.c.b16 %v506, %v504
    %v567 = vpack.c.b16 %v507, %v505
    %v568 = vpack.c.b16 %v510, %v508
    %v569 = vpack.c.b16 %v511, %v509
    %v570 = vpack.c.b16 %v514, %v512
    %v571 = vpack.c.b16 %v515, %v513
    %v572 = vpack.c.b16 %v518, %v516
    %v573 = vpack.c.b16 %v519, %v517
    %v574 = vpack.c.b16 %v522, %v520
    %v575 = vpack.c.b16 %v523, %v521
    %v576 = vpack.c.b16 %v526, %v524
    %v577 = vpack.c.b16 %v527, %v525
    %v578 = vpack.c.b16 %v530, %v528
    %v579 = vpack.c.b16 %v531, %v529
    %v580 = vpack.c.b16 %v534, %v532
    %v581 = vpack.c.b16 %v535, %v533
    %v582 = vpack.c.b16 %v538, %v536
    %v583 = vpack.c.b16 %v539, %v537
    %v584 = vpack.c.b16 %v542, %v540
    %v585 = vpack.c.b16 %v543, %v541
    %v586 = vpack.c.b16 %v546, %v544
    %v587 = vpack.c.b16 %v547, %v545
    %v588 = vpack.c.b16 %v550, %v548
    %v589 = vpack.c.b16 %v551, %v549
    %v590 = vpack.c.b16 %v554, %v552
    %v591 = vpack.c.b16 %v555, %v553
    %v592 = vpack.c.b16 %v558, %v556
    %v593 = vpack.c.b16 %v559, %v557
    %v594 = vpack.c.b16 %v562, %v560
    %v595 = vpack.c.b16 %v563, %v561
    %628 = vmatprep.subr.bf16.mxu0 %v579
    %629 = vmatpush1.bf16.msra.mxu0 %v578
    %630 = vmatprep.subr.bf16.mxu0 %v577
    %631 = vmatpush1.bf16.msra.mxu0 %v576
    %632 = vmatprep.subr.bf16.mxu0 %v575
    %633 = vmatpush1.bf16.msra.mxu0 %v574
    %634 = vmatprep.subr.bf16.mxu0 %v573
    %635 = vmatpush1.bf16.msra.mxu0 %v572
    %636 = vmatprep.subr.bf16.mxu0 %v571
    %637 = vmatpush1.bf16.msra.mxu0 %v570
    %638 = vmatprep.subr.bf16.mxu0 %v569
    %639 = vmatpush1.bf16.msra.mxu0 %v568
    %640 = vmatprep.subr.bf16.mxu0 %v567
    %641 = vmatpush1.bf16.msra.mxu0 %v566
    %642 = vmatprep.subr.bf16.mxu0 %v565
    %643 = vmatpush1.bf16.msra.mxu0 %v564
    %644 = vmatprep.subr.bf16.mxu0 %v595
    %645 = vmatpush2.bf16.msra.mxu0 %v594
    %646 = vmatprep.subr.bf16.mxu0 %v593
    %647 = vmatpush2.bf16.msra.mxu0 %v592
    %648 = vmatprep.subr.bf16.mxu0 %v591
    %649 = vmatpush2.bf16.msra.mxu0 %v590
    %650 = vmatprep.subr.bf16.mxu0 %v589
    %651 = vmatpush2.bf16.msra.mxu0 %v588
    %652 = vmatprep.subr.bf16.mxu0 %v587
    %653 = vmatpush2.bf16.msra.mxu0 %v586
    %654 = vmatprep.subr.bf16.mxu0 %v585
    %655 = vmatpush2.bf16.msra.mxu0 %v584
    %656 = vmatprep.subr.bf16.mxu0 %v583
    %657 = vmatpush2.bf16.msra.mxu0 %v582
    %658 = vmatprep.subr.bf16.mxu0 %v581
    %659 = vmatpush2.bf16.msra.mxu0 %v580
    %660 = vmatprep.mubr.bf16.mxu0 %v423
    %661 = vmatmul.mubr.bf16.gmra.mxu0 %v422
    %v662 = vpop.f32.mrf.mxu0
    %v663 = vadd.f32 %v461, %v662
    %v664 = vpop.f32.mrf.mxu0
    %v665 = vadd.f32 %v465, %v664
    %v666 = vpop.f32.mrf.mxu0
    %v667 = vpop.f32.mrf.mxu0
    %668 = vdwg.mxu0
    %v669 = vmax.f32 %v663, 0.0
    %v670 = vmax.f32 %v665, 0.0
    %v671 = vpack.c.bf16 %v669, %v669
    %v672 = vpack.c.bf16 %v670, %v670
    %v673 = vld [vmem:[#allocation10] sm:$0xf]
    %v674 = vld [vmem:[#allocation10 + $0x4] sm:$0xf]
    %v675 = vld [vmem:[#allocation10 + $0x8] sm:$0xf]
    %v676 = vld [vmem:[#allocation10 + $0xc] sm:$0xf]
    %v677 = vld [vmem:[#allocation10 + $0x10] sm:$0xf]
    %v678 = vld [vmem:[#allocation10 + $0x14] sm:$0xf]
    %v679 = vld [vmem:[#allocation10 + $0x18] sm:$0xf]
    %v680 = vld [vmem:[#allocation10 + $0x1c] sm:$0xf]
    %v681 = vld [vmem:[#allocation10 + $0x20] sm:$0xf]
    %v682 = vld [vmem:[#allocation10 + $0x24] sm:$0xf]
    %v683 = vld [vmem:[#allocation10 + $0x28] sm:$0xf]
    %v684 = vld [vmem:[#allocation10 + $0x2c] sm:$0xf]
    %v685 = vld [vmem:[#allocation10 + $0x30] sm:$0xf]
    %v686 = vld [vmem:[#allocation10 + $0x34] sm:$0xf]
    %v687 = vld [vmem:[#allocation10 + $0x38] sm:$0xf]
    %v688 = vld [vmem:[#allocation10 + $0x3c] sm:$0xf]
    %v689 = vld [vmem:[#allocation10 + $0x40] sm:$0xf]
    %v690 = vld [vmem:[#allocation10 + $0x44] sm:$0xf]
    %v691 = vld [vmem:[#allocation10 + $0x48] sm:$0xf]
    %v692 = vld [vmem:[#allocation10 + $0x4c] sm:$0xf]
    %v693 = vld [vmem:[#allocation10 + $0x50] sm:$0xf]
    %v694 = vld [vmem:[#allocation10 + $0x54] sm:$0xf]
    %v695 = vld [vmem:[#allocation10 + $0x58] sm:$0xf]
    %v696 = vld [vmem:[#allocation10 + $0x5c] sm:$0xf]
    %v697 = vld [vmem:[#allocation10 + $0x60] sm:$0xf]
    %v698 = vld [vmem:[#allocation10 + $0x64] sm:$0xf]
    %v699 = vld [vmem:[#allocation10 + $0x68] sm:$0xf]
    %v700 = vld [vmem:[#allocation10 + $0x6c] sm:$0xf]
    %v701 = vld [vmem:[#allocation10 + $0x70] sm:$0xf]
    %v702 = vld [vmem:[#allocation10 + $0x74] sm:$0xf]
    %v703 = vld [vmem:[#allocation10 + $0x78] sm:$0xf]
    %v704 = vld [vmem:[#allocation10 + $0x7c] sm:$0xf]
    %v705 = vld [vmem:[%s8] sm:$0x1]
    %v707 = vlaneseq
    %v708 = vshrl.u32 %v707, 7
    %v709 = vsub.s32 0, %v708
    %v710 = vrot.slane %v705, %v709
    %v744 = vunpack.c.l.b16 %v673
    %v745 = vunpack.c.l.b16 %v674
    %v746 = vunpack.c.l.b16 %v675
    %v747 = vunpack.c.l.b16 %v676
    %v748 = vunpack.c.l.b16 %v677
    %v749 = vunpack.c.l.b16 %v678
    %v750 = vunpack.c.l.b16 %v679
    %v751 = vunpack.c.l.b16 %v680
    %v752 = vunpack.c.l.b16 %v681
    %v753 = vunpack.c.l.b16 %v682
    %v754 = vunpack.c.l.b16 %v683
    %v755 = vunpack.c.l.b16 %v684
    %v756 = vunpack.c.l.b16 %v685
    %v757 = vunpack.c.l.b16 %v686
    %v758 = vunpack.c.l.b16 %v687
    %v759 = vunpack.c.l.b16 %v688
    %v760 = vunpack.c.l.b16 %v689
    %v761 = vunpack.c.l.b16 %v690
    %v762 = vunpack.c.l.b16 %v691
    %v763 = vunpack.c.l.b16 %v692
    %v764 = vunpack.c.l.b16 %v693
    %v765 = vunpack.c.l.b16 %v694
    %v766 = vunpack.c.l.b16 %v695
    %v767 = vunpack.c.l.b16 %v696
    %v768 = vunpack.c.l.b16 %v697
    %v769 = vunpack.c.l.b16 %v698
    %v770 = vunpack.c.l.b16 %v699
    %v771 = vunpack.c.l.b16 %v700
    %v772 = vunpack.c.l.b16 %v701
    %v773 = vunpack.c.l.b16 %v702
    %v774 = vunpack.c.l.b16 %v703
    %v775 = vunpack.c.l.b16 %v704
    %v776 = vpack.c.b16 %v745, %v744
    %v777 = vpack.c.b16 %v747, %v746
    %v778 = vpack.c.b16 %v749, %v748
    %v779 = vpack.c.b16 %v751, %v750
    %v780 = vpack.c.b16 %v753, %v752
    %v781 = vpack.c.b16 %v755, %v754
    %v782 = vpack.c.b16 %v757, %v756
    %v783 = vpack.c.b16 %v759, %v758
    %v784 = vpack.c.b16 %v761, %v760
    %v785 = vpack.c.b16 %v763, %v762
    %v786 = vpack.c.b16 %v765, %v764
    %v787 = vpack.c.b16 %v767, %v766
    %v788 = vpack.c.b16 %v769, %v768
    %v789 = vpack.c.b16 %v771, %v770
    %v790 = vpack.c.b16 %v773, %v772
    %v791 = vpack.c.b16 %v775, %v774
    %808 = vmatprep.subr.bf16.mxu0 0
    %809 = vmatpush1.bf16.msra.mxu0 %v783
    %810 = vmatprep.subr.bf16.mxu0 0
    %811 = vmatpush1.bf16.msra.mxu0 %v782
    %812 = vmatprep.subr.bf16.mxu0 0
    %813 = vmatpush1.bf16.msra.mxu0 %v781
    %814 = vmatprep.subr.bf16.mxu0 0
    %815 = vmatpush1.bf16.msra.mxu0 %v780
    %816 = vmatprep.subr.bf16.mxu0 0
    %817 = vmatpush1.bf16.msra.mxu0 %v779
    %818 = vmatprep.subr.bf16.mxu0 0
    %819 = vmatpush1.bf16.msra.mxu0 %v778
    %820 = vmatprep.subr.bf16.mxu0 0
    %821 = vmatpush1.bf16.msra.mxu0 %v777
    %822 = vmatprep.subr.bf16.mxu0 0
    %823 = vmatpush1.bf16.msra.mxu0 %v776
    %824 = vmatprep.subr.bf16.mxu0 0
    %825 = vmatpush2.bf16.msra.mxu0 %v791
    %826 = vmatprep.subr.bf16.mxu0 0
    %827 = vmatpush2.bf16.msra.mxu0 %v790
    %828 = vmatprep.subr.bf16.mxu0 0
    %829 = vmatpush2.bf16.msra.mxu0 %v789
    %830 = vmatprep.subr.bf16.mxu0 0
    %831 = vmatpush2.bf16.msra.mxu0 %v788
    %832 = vmatprep.subr.bf16.mxu0 0
    %833 = vmatpush2.bf16.msra.mxu0 %v787
    %834 = vmatprep.subr.bf16.mxu0 0
    %835 = vmatpush2.bf16.msra.mxu0 %v786
    %836 = vmatprep.subr.bf16.mxu0 0
    %837 = vmatpush2.bf16.msra.mxu0 %v785
    %838 = vmatprep.subr.bf16.mxu0 0
    %839 = vmatpush2.bf16.msra.mxu0 %v784
    %840 = vmatprep.mubr.bf16.mxu0 %v672
    %841 = vmatmul.mubr.bf16.gmra.mxu0 %v671
    %v842 = vpop.f32.mrf.mxu0
    %v843 = vadd.f32 %v710, %v842
    %v844 = vpop.f32.mrf.mxu0
    %v845 = vpop.f32.mrf.mxu0
    %v846 = vpop.f32.mrf.mxu0
    %847 = vdwg.mxu0
    %v848 = vlaneseq
    %v849 = vand.u32 %v848, 127
    %v850 = vtanh.pop %v843
    %v851 = vmul.f32 %v850, 3.5
    %v852 = vadd.f32 %v851, -1.5
    %vm853 = vcmp.ge.s32.totalorder %v849, 64
    %v854 = vsel %vm853, %v852, %v843
    %855 = vst [vmem:[#allocation11] sm:$0x3] %v854
    // Predicated region
    $region58: #{tpu_custom_call.1} parent=1 // pred_check
      _
    $region59: #{tpu_custom_call.1} parent=1 // pred_check_branch
      %857 = sbr.rel (0) target = $region61
    $region60: #{tpu_custom_call.1} parent=1 // pred_region
      %s859 = ssub.s32 32, 32
      %860 = vsyncadd [#allocation4], %s859
      %s862 = sshll.u32 [#allocation11], 4
      %s863 = int_to_ptr.vmem [resolvable:$true] %s862
      %865 = dma.vmem_to_hbm [thread:$0]  %s863, 32, %s9, [#allocation4]
    $region61: #{tpu_custom_call.1} parent=1 // pred_fallthru
      _
    // Predicated region
    $region62: #{tpu_custom_call.1} parent=1 // pred_check
      _
    $region63: #{tpu_custom_call.1} parent=1 // pred_check_branch
      %867 = sbr.rel (0) target = $region65
    $region64: #{tpu_custom_call.1} parent=1 // pred_region
      %868 = dma.done [#allocation4], 32
    $region65: #{tpu_custom_call.1} parent=1 // pred_fallthru
      _
    %869 = vsyncpa [#allocation3], 1
    %870 = vsyncpa [#allocation6], 1
    %871 = vsyncpa [#allocation9], 1
    %872 = vsyncpa [#allocation4], 1

</llo_original>
